<compile_context>
chip_gen: v7x
topology: tpu7x:2x2x1
jax: 0.10.0
libtpu: 0.0.40
codegen_flags: <defaults>
</compile_context>

<pallas_src>
import functools
import math

import jax
import jax.numpy as jnp
from jax.experimental import pallas as pl
from jax.experimental.pallas import tpu as pltpu


def _noise_add_kernel(x_ref, w_ref, n_ref, o_ref):
    # w*noise formed in-kernel in f32; broadcast add over the row tile.
    wn = w_ref[...] * n_ref[...]                                   # (1, TL) f32
    o_ref[...] = (x_ref[...].astype(jnp.float32) + wn).astype(o_ref.dtype)


def _cdiv(a, b):
    return -(-a // b)


def _round_up(v, m):
    return _cdiv(v, m) * m


@functools.partial(jax.jit, static_argnames=("tile_budget_bytes",))
def noise_layer_forward(x, w, noise, *, tile_budget_bytes=16 * 1024 * 1024):
    """y = x + w * noise, broadcast over all leading dims of x (last dim = N)."""
    orig_shape = x.shape
    N = orig_shape[-1]
    dtype = x.dtype
    itemsize = jnp.dtype(dtype).itemsize

    x2d = x.reshape(-1, N)
    B = x2d.shape[0]

    # ---- lane-dense fold: (B, N) -> (B2, N2) with N2 % 128 == 0 -------------
    k = 1 if N % 128 == 0 else 128 // math.gcd(N, 128)
    pad = (-B) % k
    if pad:
        x2d = jnp.pad(x2d, ((0, pad), (0, 0)))
    Bp = B + pad
    B2, N2 = Bp // k, N * k
    x2 = x2d.reshape(B2, N2)

    w32 = w.astype(jnp.float32)
    n32 = noise.astype(jnp.float32)
    if k > 1:
        w_row = jnp.tile(w32, k).reshape(1, N2)
        n_row = jnp.tile(n32, k).reshape(1, N2)
    else:
        w_row = w32.reshape(1, N2)
        n_row = n32.reshape(1, N2)

    # ---- tiling --------------------------------------------------------------
    sub = {4: 8, 2: 16, 1: 32}.get(itemsize, 8)   # dtype-aware sublane multiple

    # Lane tile: full (folded) row if a minimal-row double-buffered x+out tile
    # fits the budget; otherwise chunk lanes (2-D grid keeps tiles in VMEM).
    max_tl = max(128, (tile_budget_bytes // (4 * sub * itemsize)) // 128 * 128)
    TL = N2 if N2 <= max_tl else max_tl
    GL = _cdiv(N2, TL)

    # Row tile: aim for ~4 grid steps (and >= 2 when possible so both v7x
    # TensorCores get work), clamped to the VMEM budget and sublane-rounded.
    rows_cap = max(sub, (tile_budget_bytes // (4 * TL * itemsize)) // sub * sub)
    target_steps = 4
    TB = min(rows_cap, max(sub, _round_up(_cdiv(B2, target_steps), sub)))
    if TB >= B2:
        if B2 > sub:
            TB = min(TB, _round_up(_cdiv(B2, 2), sub))   # still split for megacore
        else:
            TB = B2                                      # tiny batch: exact block
    GR = _cdiv(B2, TB)

    # Generation-safe: >= 2x budget headroom, but capped well under v7x's 64 MiB.
    vmem_limit = min(48 * 1024 * 1024, max(32 * 1024 * 1024, 2 * tile_budget_bytes))

    out2 = pl.pallas_call(
        _noise_add_kernel,
        out_shape=jax.ShapeDtypeStruct((B2, N2), dtype),
        grid=(GR, GL),
        in_specs=[
            pl.BlockSpec((TB, TL), lambda i, j: (i, j)),   # row/lane-tiled x
            pl.BlockSpec((1, TL), lambda i, j: (0, j)),    # resident w row
            pl.BlockSpec((1, TL), lambda i, j: (0, j)),    # resident noise row
        ],
        out_specs=pl.BlockSpec((TB, TL), lambda i, j: (i, j)),
        compiler_params=pltpu.CompilerParams(
            dimension_semantics=("parallel", "parallel"),  # megacore on v7x
            vmem_limit_bytes=vmem_limit,
        ),
    )(x2, w_row, n_row)

    out = out2.reshape(Bp, N)
    if pad:
        out = out[:B]
    return out.reshape(orig_shape)


class NoiseLayer:
    """JAX/Pallas port of the PyTorch NoiseLayer: y = x + w * N(0,1)-noise."""

    def __init__(self, inputs_count, init_range=0.1, *, key):
        self.inputs_count = inputs_count
        # w_initial = init_range * rand(inputs_count)   (uniform in [0, 1))
        self.w = init_range * jax.random.uniform(
            key, (inputs_count,), dtype=jnp.float32
        )

    def __call__(self, x, *, noise_key):
        # Fresh N(0,1) draw per call (plain-JAX glue, bit-reproducible from key).
        # TODO(synk): optionally fuse the draw in-kernel (pltpu.prng_seed +
        # pltpu.stateful_normal) to drop this extra dispatch for tiny shapes.
        noise = jax.random.normal(
            noise_key, (self.inputs_count,), dtype=jnp.float32
        )
        return noise_layer_forward(x, self.w, noise), noise


if __name__ == "__main__":
    key = jax.random.PRNGKey(0)
    k_w, k_x1, k_n1, k_x2, k_n2, k_x3, k_n3 = jax.random.split(key, 7)

    inputs_count = 32
    layer = NoiseLayer(inputs_count, init_range=0.1, key=k_w)

    # Test 1: tiny batch, N=32 -> batch padded 2->4, lane-folded to (1, 128).
    x1 = jax.random.normal(k_x1, (2, inputs_count), dtype=jnp.float32)
    out1, noise1 = layer(x1, noise_key=k_n1)
    out1 = jax.block_until_ready(out1)
    ref1 = x1 + layer.w * noise1
    assert out1.shape == x1.shape
    assert jnp.allclose(out1, ref1, atol=1e-6), "mismatch vs reference (test 1)"

    # Test 2: batch 256 -> lane-folded to (64, 128), multi-step row grid.
    x2 = jax.random.normal(k_x2, (256, inputs_count), dtype=jnp.float32)
    out2, noise2 = layer(x2, noise_key=k_n2)
    out2 = jax.block_until_ready(out2)
    ref2 = x2 + layer.w * noise2
    assert out2.shape == x2.shape
    assert jnp.allclose(out2, ref2, atol=1e-6), "mismatch vs reference (test 2)"

    # Test 3: N=128 (no fold), batch 40 -> partial last row block handled.
    layer3 = NoiseLayer(128, init_range=0.1, key=k_w)
    x3 = jax.random.normal(k_x3, (40, 128), dtype=jnp.float32)
    out3, noise3 = layer3(x3, noise_key=k_n3)
    out3 = jax.block_until_ready(out3)
    ref3 = x3 + layer3.w * noise3
    assert out3.shape == x3.shape
    assert jnp.allclose(out3, ref3, atol=1e-6), "mismatch vs reference (test 3)"

    print("KERNEL_OK")
</pallas_src>

<mosaic_0001>
module attributes {stable_mosaic.version = 11 : i64} {
  func.func @_noise_add_kernel(%arg0: i32, %arg1: i32, %arg2: memref<1x128xf32, #tpu.memory_space<vmem>>, %arg3: memref<1x128xf32, #tpu.memory_space<vmem>>, %arg4: memref<1x128xf32, #tpu.memory_space<vmem>>, %arg5: memref<1x128xf32, #tpu.memory_space<vmem>>) attributes {dimension_semantics = [#tpu.dimension_semantics<parallel>, #tpu.dimension_semantics<parallel>], iteration_bounds = array<i64: 1, 1>, scalar_prefetch = 0 : i64, scratch_operands = 0 : i64, tpu.core_type = #tpu.core_type<tc>, window_params = [{transform_indices = @transform_0, window_bounds = array<i64: 1, 128>}, {transform_indices = @transform_1, window_bounds = array<i64: 1, 128>}, {transform_indices = @transform_2, window_bounds = array<i64: 1, 128>}, {transform_indices = @transform_3, window_bounds = array<i64: 1, 128>}]} {
    %c0 = arith.constant 0 : index
    %c0_0 = arith.constant 0 : index
    %0 = vector.load %arg3[%c0, %c0_0] : memref<1x128xf32, #tpu.memory_space<vmem>>, vector<1x128xf32>
    %c0_1 = arith.constant 0 : index
    %c0_2 = arith.constant 0 : index
    %1 = vector.load %arg4[%c0_1, %c0_2] : memref<1x128xf32, #tpu.memory_space<vmem>>, vector<1x128xf32>
    %2 = arith.mulf %0, %1 : vector<1x128xf32>
    %c0_3 = arith.constant 0 : index
    %c0_4 = arith.constant 0 : index
    %3 = vector.load %arg2[%c0_3, %c0_4] : memref<1x128xf32, #tpu.memory_space<vmem>>, vector<1x128xf32>
    %4 = arith.addf %3, %2 : vector<1x128xf32>
    %c0_5 = arith.constant 0 : index
    %c0_6 = arith.constant 0 : index
    %5 = vector.load %arg5[%c0_5, %c0_6] : memref<1x128xf32, #tpu.memory_space<vmem>>, vector<1x128xf32>
    tpu.vector_store %arg5[%c0_5, %c0_6], %4 {strides = array<i32>} : memref<1x128xf32, #tpu.memory_space<vmem>>, vector<1x128xf32>,
    return
  }
  func.func @transform_0(%arg0: i32, %arg1: i32) -> (i32, i32) {
    %c0_i32 = arith.constant 0 : i32
    return %arg0, %arg1 : i32, i32
  }
  func.func @transform_1(%arg0: i32, %arg1: i32) -> (i32, i32) {
    %c0_i32 = arith.constant 0 : i32
    %c0_i32_0 = arith.constant 0 : i32
    return %c0_i32, %arg1 : i32, i32
  }
  func.func @transform_2(%arg0: i32, %arg1: i32) -> (i32, i32) {
    %c0_i32 = arith.constant 0 : i32
    %c0_i32_0 = arith.constant 0 : i32
    return %c0_i32, %arg1 : i32, i32
  }
  func.func @transform_3(%arg0: i32, %arg1: i32) -> (i32, i32) {
    %c0_i32 = arith.constant 0 : i32
    return %arg0, %arg1 : i32, i32
  }
}

</mosaic_0001>

<llo_original>
// kernel: tile.13
$region0: #{tile.13}
  #allocation0 [shape = 's32[1]{0}', space=sflag, size = 0x4, scoped, tag = 'scoped memory for tile.13']
  %s0 = inlined_call_operand.vmem [shape: f32[32], index: 0, kind: input, shape index: {}]
  %s1 = inlined_call_operand.vmem [shape: f32[4,32], index: 1, kind: output, shape index: {}]
  // Predicated region
  $region2: #{tile.13} parent=0 // pred_check
    _
  $region3: #{tile.13} parent=0 // pred_check_branch
    %3 = sbr.rel (0) target = $region5
  $region4: #{tile.13} parent=0 // pred_region
    _
  $region5: #{tile.13} parent=0 // pred_fallthru
    _
  %v4 = vld [vmem:[%s0] ss:$0 sm:$0xff]
  %5 = vst [vmem:[%s1] sm:$0xf] %v4

// kernel: noise_layer_forward.1
$region0: #{noise_layer_forward.1}
  #allocation0 [shape = 'u32[]', space=smem, size = 0x4, offset = 0x4, fixed_abs, tag = 'smem constant byte address 0x4 - core index']
  #allocation1 [shape = 'u32[144,128]{1,0:T(1,128)}', space=vmem, size = 0x12000, scoped, tag = 'internal scratch']
  %s0 = inlined_call_operand.vmem [shape: f32[1,128], index: 0, kind: input, shape index: {}]
  %s1 = inlined_call_operand.vmem [shape: f32[1,128], index: 1, kind: input, shape index: {}]
  %s2 = inlined_call_operand.vmem [shape: f32[1,128], index: 2, kind: input, shape index: {}]
  %s3 = inlined_call_operand.vmem [shape: f32[1,128], index: 3, kind: output, shape index: {}]
  %s4 = sld [smem:[#allocation0]]
  $region22: #{noise_layer_forward.1} parent=0
    _
  %s6 = ssub.s32 1, %s4
  %s7 = scalar_select 0, %s6, %s4
  // Predicated region
  $region2: #{noise_layer_forward.1} parent=0 // pred_check
    _
  $region3: #{noise_layer_forward.1} parent=0 // pred_check_branch
    %9 = sbr.rel (0) target = $region5
  $region4: #{noise_layer_forward.1} parent=0 // pred_region
    _
  $region5: #{noise_layer_forward.1} parent=0 // pred_fallthru
    _
  // Predicated region
  $region6: #{noise_layer_forward.1} parent=0 // pred_check
    _
  $region7: #{noise_layer_forward.1} parent=0 // pred_check_branch
    %11 = sbr.rel (0) target = $region9
  $region8: #{noise_layer_forward.1} parent=0 // pred_region
    _
  $region9: #{noise_layer_forward.1} parent=0 // pred_fallthru
    _
  // Predicated region
  $region10: #{noise_layer_forward.1} parent=0 // pred_check
    _
  $region11: #{noise_layer_forward.1} parent=0 // pred_check_branch
    %13 = sbr.rel (0) target = $region13
  $region12: #{noise_layer_forward.1} parent=0 // pred_region
    _
  $region13: #{noise_layer_forward.1} parent=0 // pred_fallthru
    _
  %v14 = vld [vmem:[%s1] sm:$0x1]
  %v15 = vld [vmem:[%s2] sm:$0x1]
  %v16 = vmul.f32 %v14, %v15
  %v17 = vld [vmem:[%s0] sm:$0x1]
  %v18 = vadd.f32 %v17, %v16
  %19 = vst [vmem:[%s3] sm:$0x1] %v18
  // Predicated region
  $region14: #{noise_layer_forward.1} parent=0 // pred_check
    _
  $region15: #{noise_layer_forward.1} parent=0 // pred_check_branch
    %21 = sbr.rel (0) target = $region17
  $region16: #{noise_layer_forward.1} parent=0 // pred_region
    _
  $region17: #{noise_layer_forward.1} parent=0 // pred_fallthru
    _
  // Predicated region
  $region18: #{noise_layer_forward.1} parent=0 // pred_check
    _
  $region19: #{noise_layer_forward.1} parent=0 // pred_check_branch
    %23 = sbr.rel (0) target = $region21
  $region20: #{noise_layer_forward.1} parent=0 // pred_region
    _
  $region21: #{noise_layer_forward.1} parent=0 // pred_fallthru
    _

</llo_original>
